<compile_context>
chip_gen: v5e
topology: v5e:2x2
jax: 0.10.0
libtpu: 0.0.40
codegen_flags: <defaults>
</compile_context>

<pallas_src>
import functools
import math

import jax
import jax.numpy as jnp
from jax import lax
from jax.experimental import pallas as pl
from jax.experimental.pallas import tpu as pltpu

_NEG_INF = -1e30
_MIB = 1024 * 1024


# --------------------------------------------------------------------------------------
# Kernel 1: GroupNorm (affine folded into weights) + QKV projection.  grid = (B,)
# --------------------------------------------------------------------------------------
def _norm_qkv_kernel(x_ref, wqkv_ref, bqkv_ref, q_ref, k_ref, v_ref, *,
                     norm_groups, n_actual, eps):
    """x_ref: (1, C, S_pad); wqkv_ref: (3C, C) bf16 (gamma & 1/sqrt(d) folded);
    bqkv_ref: (3C, 1) f32 (beta folded); q/k/v_ref: (1, C, S_pad) bf16."""
    x = x_ref[0].astype(jnp.float32)                       # (C, S_pad)
    C, Sp = x.shape
    g = norm_groups
    cpg = C // g

    # Single-pass GroupNorm stats.  Padding columns are zeros, so sums are unaffected;
    # divide by the *actual* element count (cpg * S), not the padded one.
    x3 = x.reshape(g, cpg, Sp)
    n = jnp.float32(n_actual)
    s1 = jnp.sum(jnp.sum(x3, axis=2, keepdims=True), axis=1, keepdims=True)
    s2 = jnp.sum(jnp.sum(x3 * x3, axis=2, keepdims=True), axis=1, keepdims=True)
    mean = s1 / n
    var = s2 / n - mean * mean
    xn = ((x3 - mean) * lax.rsqrt(var + eps)).reshape(C, Sp)

    # QKV projection (1x1 conv == channel matmul).  Affine + q-scale already folded.
    qkv = jnp.dot(wqkv_ref[...], xn.astype(wqkv_ref.dtype),
                  preferred_element_type=jnp.float32)
    qkv = (qkv + bqkv_ref[...]).astype(q_ref.dtype)
    q_ref[0] = qkv[0 * C:1 * C]
    k_ref[0] = qkv[1 * C:2 * C]
    v_ref[0] = qkv[2 * C:3 * C]

    # TODO(synk): for very large C*S the GroupNorm stats could themselves be tiled
    #             (two-pass stats kernel); not needed at these sizes.


# --------------------------------------------------------------------------------------
# Kernel 2: flash attention (online softmax over key tiles) + out-proj + residual.
#           grid = (B, num_q_tiles, num_k_tiles), key axis innermost / "arbitrary".
# --------------------------------------------------------------------------------------
def _flash_attn_kernel(q_ref, k_ref, v_ref, x_ref, wo_ref, bo_ref, o_ref,
                       m_ref, l_ref, acc_ref, *, num_heads, s_actual, s_pad, tk):
    ki = pl.program_id(2)
    nk = pl.num_programs(2)

    @pl.when(ki == 0)
    def _():
        m_ref[...] = jnp.full(m_ref.shape, _NEG_INF, m_ref.dtype)
        l_ref[...] = jnp.zeros(l_ref.shape, l_ref.dtype)
        acc_ref[...] = jnp.zeros(acc_ref.shape, acc_ref.dtype)

    C, TQ = q_ref.shape[1], q_ref.shape[2]
    d = C // num_heads
    cdt = q_ref.dtype                                       # bf16 MXU operand dtype

    q_h = q_ref[0].reshape(num_heads, d, TQ)                # (h, d, Tq)
    k_h = k_ref[0].reshape(num_heads, d, tk)                # (h, d, Tk)
    v_h = v_ref[0].reshape(num_heads, d, tk)                # (h, d, Tk)

    # Scores in (h, Tk, Tq) orientation: keys on sublanes, queries on lanes.  The later
    # PV matmul then consumes P in standard (k, n) form (no transpose of the big operand).
    s = lax.dot_general(k_h, q_h,
                        dimension_numbers=(((1,), (1,)), ((0,), (0,))),
                        preferred_element_type=jnp.float32)  # (h, Tk, Tq)

    if s_pad != s_actual:                                    # static: mask padded keys
        key_idx = ki * tk + lax.broadcasted_iota(jnp.int32, s.shape, 1)
        s = jnp.where(key_idx < s_actual, s, _NEG_INF)

    # Online softmax with deferred normalization (P stays unnormalized, <= 1).
    m_prev = m_ref[...]                                      # (h, 1, Tq)
    m_curr = jnp.max(s, axis=1, keepdims=True)
    m_new = jnp.maximum(m_prev, m_curr)
    alpha = jnp.exp(m_prev - m_new)
    p = jnp.exp(s - m_new)                                   # (h, Tk, Tq) f32
    l_ref[...] = alpha * l_ref[...] + jnp.sum(p, axis=1, keepdims=True)
    pv = lax.dot_general(v_h, p.astype(cdt),
                         dimension_numbers=(((2,), (1,)), ((0,), (0,))),
                         preferred_element_type=jnp.float32)  # (h, d, Tq)
    acc_ref[...] = alpha * acc_ref[...] + pv
    m_ref[...] = m_new

    @pl.when(ki == nk - 1)
    def _():
        attn = acc_ref[...] * pl.reciprocal(l_ref[...], approx=True)   # (h, d, Tq)
        attn = attn.reshape(C, TQ)
        out = jnp.dot(wo_ref[...], attn.astype(cdt),
                      preferred_element_type=jnp.float32)               # (C, Tq)
        out = out + bo_ref[...]
        o_ref[0] = (x_ref[0].astype(jnp.float32) + out).astype(o_ref.dtype)


# --------------------------------------------------------------------------------------
# Wrapper
# --------------------------------------------------------------------------------------
def base_attention_forward(x_nchw, w_qkv, b_qkv, w_out, b_out, gamma, beta,
                           *, num_heads, norm_groups, eps=1e-5):
    """x_nchw: (B, C, H, W) -> (B, C, H, W). 1x1-conv weights in PyTorch OIHW form."""
    B, C, H, W = x_nchw.shape
    S = H * W
    assert C % num_heads == 0, (C, num_heads)
    assert C % norm_groups == 0, (C, norm_groups)
    d = C // num_heads

    # ---- spatial tiling: pad S to a multiple of the tile so every store is lane-dense
    tile = 256 if (S % 256 == 0 and S >= 256) else 128
    S_pad = pl.cdiv(S, tile) * tile
    TQ = TK = tile
    nq = S_pad // TQ
    nk = S_pad // TK

    x = x_nchw.reshape(B, C, S)
    if S_pad != S:
        x = jnp.pad(x, ((0, 0), (0, 0), (0, S_pad - S)))
    x_bytes = x.dtype.itemsize

    # ---- one-time weight transforms (amortized over every call / batch element) -------
    wqkv = w_qkv.reshape(3 * C, C).astype(jnp.float32)
    bqkv = b_qkv.reshape(3 * C).astype(jnp.float32)
    gamma_f = gamma.reshape(C).astype(jnp.float32)
    beta_f = beta.reshape(C).astype(jnp.float32)
    # Fold GroupNorm affine (xn*gamma + beta is only consumed by the QKV matmul).
    bqkv_eff = bqkv + wqkv @ beta_f
    wqkv_eff = wqkv * gamma_f[None, :]
    # Fold 1/sqrt(d) into the Q rows.
    scale = 1.0 / math.sqrt(d)
    wqkv_eff = wqkv_eff.at[:C].multiply(scale)
    bqkv_eff = bqkv_eff.at[:C].multiply(scale)

    wqkv_bf = wqkv_eff.astype(jnp.bfloat16)
    bqkv2 = bqkv_eff.reshape(3 * C, 1)                      # f32
    wo_bf = w_out.reshape(C, C).astype(jnp.bfloat16)
    bo2 = b_out.reshape(C, 1).astype(jnp.float32)

    # ---- kernel 1: GroupNorm + QKV --------------------------------------------------
    n_actual = (C // norm_groups) * S
    k1 = functools.partial(_norm_qkv_kernel, norm_groups=norm_groups,
                           n_actual=n_actual, eps=eps)
    k1_bytes = (2 * (C * S_pad * x_bytes + 3 * C * S_pad * 2)     # x in + q/k/v out (2-buf)
                + 2 * (3 * C * C * 2 + 3 * C * 4)                 # weights/bias (2-buf)
                + 4 * C * S_pad * 4)                              # f32 temporaries
    vmem1 = int(min(48 * _MIB, max(16 * _MIB, 2 * k1_bytes)))
    k1_flops = int(B * (6 * C * C * S_pad + 8 * C * S_pad))
    k1_bytes_acc = int(B * C * S_pad * (x_bytes + 3 * 2) + 3 * C * C * 2 + 3 * C * 4)

    q, k, v = pl.pallas_call(
        k1,
        out_shape=(jax.ShapeDtypeStruct((B, C, S_pad), jnp.bfloat16),
                   jax.ShapeDtypeStruct((B, C, S_pad), jnp.bfloat16),
                   jax.ShapeDtypeStruct((B, C, S_pad), jnp.bfloat16)),
        grid=(B,),
        in_specs=[
            pl.BlockSpec((1, C, S_pad), lambda b: (b, 0, 0)),     # x
            pl.BlockSpec((3 * C, C), lambda b: (0, 0)),           # wqkv (VMEM-resident)
            pl.BlockSpec((3 * C, 1), lambda b: (0, 0)),           # bqkv
        ],
        out_specs=(pl.BlockSpec((1, C, S_pad), lambda b: (b, 0, 0)),
                   pl.BlockSpec((1, C, S_pad), lambda b: (b, 0, 0)),
                   pl.BlockSpec((1, C, S_pad), lambda b: (b, 0, 0))),
        compiler_params=pltpu.CompilerParams(
            dimension_semantics=("parallel",),
            vmem_limit_bytes=vmem1,
        ),
        cost_estimate=pl.CostEstimate(flops=k1_flops, transcendentals=0,
                                      bytes_accessed=k1_bytes_acc),
    )(x, wqkv_bf, bqkv2)

    # ---- kernel 2: flash attention + output projection + residual -------------------
    k2 = functools.partial(_flash_attn_kernel, num_heads=num_heads,
                           s_actual=S, s_pad=S_pad, tk=TK)
    k2_bytes = (2 * (C * TQ * 2 + 2 * C * TK * 2 + 2 * C * TQ * x_bytes)   # q,k,v,x,out (2-buf)
                + 2 * (C * C * 2 + C * 4)                                  # wo, bo (2-buf)
                + 2 * num_heads * 8 * TQ * 4 + C * TQ * 4                  # m, l, acc scratch
                + 2 * num_heads * TK * TQ * 4)                             # s/p temporaries
    vmem2 = int(min(48 * _MIB, max(16 * _MIB, 4 * k2_bytes)))
    k2_flops = int(B * (4 * S_pad * S_pad * C + 2 * C * C * S_pad))
    k2_trans = int(B * num_heads * S_pad * S_pad)
    k2_bytes_acc = int(B * C * S_pad * (3 * 2 + 2 * x_bytes) + C * C * 2 + C * 4)

    out = pl.pallas_call(
        k2,
        out_shape=jax.ShapeDtypeStruct((B, C, S_pad), x.dtype),
        grid=(B, nq, nk),
        in_specs=[
            pl.BlockSpec((1, C, TQ), lambda b, qi, ki: (b, 0, qi)),   # q tile
            pl.BlockSpec((1, C, TK), lambda b, qi, ki: (b, 0, ki)),   # k tile
            pl.BlockSpec((1, C, TK), lambda b, qi, ki: (b, 0, ki)),   # v tile
            pl.BlockSpec((1, C, TQ), lambda b, qi, ki: (b, 0, qi)),   # x (residual)
            pl.BlockSpec((C, C), lambda b, qi, ki: (0, 0)),           # wo
            pl.BlockSpec((C, 1), lambda b, qi, ki: (0, 0)),           # bo
        ],
        out_specs=pl.BlockSpec((1, C, TQ), lambda b, qi, ki: (b, 0, qi)),
        scratch_shapes=[
            pltpu.VMEM((num_heads, 1, TQ), jnp.float32),              # m (running max)
            pltpu.VMEM((num_heads, 1, TQ), jnp.float32),              # l (running sum)
            pltpu.VMEM((num_heads, d, TQ), jnp.float32),              # acc (unnormalized O)
        ],
        compiler_params=pltpu.CompilerParams(
            dimension_semantics=("parallel", "parallel", "arbitrary"),
            vmem_limit_bytes=vmem2,
        ),
        cost_estimate=pl.CostEstimate(flops=k2_flops, transcendentals=k2_trans,
                                      bytes_accessed=k2_bytes_acc),
    )(q, k, v, x, wo_bf, bo2)

    if S_pad != S:
        out = out[:, :, :S]
    return out.reshape(B, C, H, W)


if __name__ == "__main__":
    # Small shapes consistent with the module: dim=32 channels, 4 heads, 4 norm groups,
    # spatial 16x16 (S = 256 -> two 128-wide query tiles x two key tiles), batch 2.
    B, C, H, W = 2, 32, 16, 16
    num_heads = 4
    norm_groups = 4

    key = jax.random.PRNGKey(0)
    kx, kq, kbq, ko, kbo = jax.random.split(key, 5)
    x = jax.random.normal(kx, (B, C, H, W), dtype=jnp.float32)
    # 1x1-conv weights in PyTorch OIHW layout; deterministic init.
    w_qkv = jax.random.normal(kq, (3 * C, C, 1, 1), dtype=jnp.float32) * 0.02
    b_qkv = jax.random.normal(kbq, (3 * C,), dtype=jnp.float32) * 0.01
    w_out = jax.random.normal(ko, (C, C, 1, 1), dtype=jnp.float32) * 0.02
    b_out = jax.random.normal(kbo, (C,), dtype=jnp.float32) * 0.01
    gamma = jnp.ones((C,), dtype=jnp.float32)   # GroupNorm default affine init
    beta = jnp.zeros((C,), dtype=jnp.float32)

    y = base_attention_forward(x, w_qkv, b_qkv, w_out, b_out, gamma, beta,
                               num_heads=num_heads, norm_groups=norm_groups)
    jax.block_until_ready(y)
    assert y.shape == (B, C, H, W), y.shape
    assert bool(jnp.isfinite(y).all()), "non-finite values in output"
    print("KERNEL_OK")
</pallas_src>

<mosaic_0001>
module attributes {stable_mosaic.version = 11 : i64} {
  func.func @_norm_qkv_kernel(%arg0: i32, %arg1: memref<1x32x256xf32, #tpu.memory_space<vmem>>, %arg2: memref<96x32xbf16, #tpu.memory_space<vmem>>, %arg3: memref<96x1xf32, #tpu.memory_space<vmem>>, %arg4: memref<1x32x256xbf16, #tpu.memory_space<vmem>>, %arg5: memref<1x32x256xbf16, #tpu.memory_space<vmem>>, %arg6: memref<1x32x256xbf16, #tpu.memory_space<vmem>>) attributes {dimension_semantics = [#tpu.dimension_semantics<parallel>], iteration_bounds = array<i64: 2>, scalar_prefetch = 0 : i64, scratch_operands = 0 : i64, tpu.core_type = #tpu.core_type<tc>, window_params = [{transform_indices = @transform_0, window_bounds = array<i64: 1, 32, 256>}, {pipeline_mode = #tpu.pipeline_mode<synchronous>, transform_indices = @transform_1, window_bounds = array<i64: 96, 32>}, {pipeline_mode = #tpu.pipeline_mode<synchronous>, transform_indices = @transform_2, window_bounds = array<i64: 96, 1>}, {transform_indices = @transform_3, window_bounds = array<i64: 1, 32, 256>}, {transform_indices = @transform_4, window_bounds = array<i64: 1, 32, 256>}, {transform_indices = @transform_5, window_bounds = array<i64: 1, 32, 256>}]} {
    %c0 = arith.constant 0 : index
    %c0_0 = arith.constant 0 : index
    %c0_1 = arith.constant 0 : index
    %0 = vector.load %arg1[%c0, %c0_0, %c0_1] : memref<1x32x256xf32, #tpu.memory_space<vmem>>, vector<1x32x256xf32>
    %1 = vector.shape_cast %0 : vector<1x32x256xf32> to vector<32x256xf32>
    %2 = vector.shape_cast %1 : vector<32x256xf32> to vector<4x8x256xf32>
    %cst = arith.constant dense<0.000000e+00> : vector<4x8xf32>
    %3 = vector.multi_reduction <add>, %2, %cst [2] : vector<4x8x256xf32> to vector<4x8xf32>
    %4 = vector.shape_cast %3 : vector<4x8xf32> to vector<4x8x1xf32>
    %cst_2 = arith.constant dense<0.000000e+00> : vector<4x1xf32>
    %5 = vector.multi_reduction <add>, %4, %cst_2 [1] : vector<4x8x1xf32> to vector<4x1xf32>
    %6 = vector.shape_cast %5 : vector<4x1xf32> to vector<4x1x1xf32>
    %7 = arith.mulf %2, %2 : vector<4x8x256xf32>
    %cst_3 = arith.constant dense<0.000000e+00> : vector<4x8xf32>
    %8 = vector.multi_reduction <add>, %7, %cst_3 [2] : vector<4x8x256xf32> to vector<4x8xf32>
    %9 = vector.shape_cast %8 : vector<4x8xf32> to vector<4x8x1xf32>
    %cst_4 = arith.constant dense<0.000000e+00> : vector<4x1xf32>
    %10 = vector.multi_reduction <add>, %9, %cst_4 [1] : vector<4x8x1xf32> to vector<4x1xf32>
    %11 = vector.shape_cast %10 : vector<4x1xf32> to vector<4x1x1xf32>
    %cst_5 = arith.constant 2.048000e+03 : f32
    %12 = vector.broadcast %cst_5 : f32 to vector<4x1x1xf32>
    %13 = arith.divf %6, %12 : vector<4x1x1xf32>
    %cst_6 = arith.constant 2.048000e+03 : f32
    %14 = vector.broadcast %cst_6 : f32 to vector<4x1x1xf32>
    %15 = arith.divf %11, %14 : vector<4x1x1xf32>
    %16 = arith.mulf %13, %13 : vector<4x1x1xf32>
    %17 = arith.subf %15, %16 : vector<4x1x1xf32>
    %18 = vector.broadcast %13 : vector<4x1x1xf32> to vector<4x8x256xf32>
    %19 = arith.subf %2, %18 : vector<4x8x256xf32>
    %cst_7 = arith.constant 9.99999974E-6 : f32
    %20 = vector.broadcast %cst_7 : f32 to vector<4x1x1xf32>
    %21 = arith.addf %17, %20 : vector<4x1x1xf32>
    %22 = math.rsqrt %21 : vector<4x1x1xf32>
    %23 = vector.broadcast %22 : vector<4x1x1xf32> to vector<4x8x256xf32>
    %24 = arith.mulf %19, %23 : vector<4x8x256xf32>
    %25 = vector.shape_cast %24 : vector<4x8x256xf32> to vector<32x256xf32>
    %c0_8 = arith.constant 0 : index
    %c0_9 = arith.constant 0 : index
    %26 = vector.load %arg2[%c0_8, %c0_9] : memref<96x32xbf16, #tpu.memory_space<vmem>>, vector<96x32xbf16>
    %27 = arith.truncf %25 : vector<32x256xf32> to vector<32x256xbf16>
    %cst_10 = arith.constant dense<0.000000e+00> : vector<96x256xf32>
    %28 = tpu.matmul %26, %27, %cst_10 {dimension_numbers = #tpu.dot_dimension_numbers<[1], [0], [0], [1], [0, 0, 1, 1], [], []>} : vector<96x32xbf16>, vector<32x256xbf16>, vector<96x256xf32> -> vector<96x256xf32>
    %c0_11 = arith.constant 0 : index
    %c0_12 = arith.constant 0 : index
    %29 = vector.load %arg3[%c0_11, %c0_12] : memref<96x1xf32, #tpu.memory_space<vmem>>, vector<96x1xf32>
    %30 = vector.broadcast %29 : vector<96x1xf32> to vector<96x256xf32>
    %31 = arith.addf %28, %30 : vector<96x256xf32>
    %32 = arith.truncf %31 : vector<96x256xf32> to vector<96x256xbf16>
    %33 = vector.extract_strided_slice %32 {offsets = [0, 0], sizes = [32, 256], strides = [1, 1]} : vector<96x256xbf16> to vector<32x256xbf16>
    %c0_13 = arith.constant 0 : index
    %c0_14 = arith.constant 0 : index
    %c0_15 = arith.constant 0 : index
    %34 = vector.load %arg4[%c0_13, %c0_14, %c0_15] : memref<1x32x256xbf16, #tpu.memory_space<vmem>>, vector<1x32x256xbf16>
    %35 = vector.shape_cast %34 : vector<1x32x256xbf16> to vector<32x256xbf16>
    %36 = vector.shape_cast %33 : vector<32x256xbf16> to vector<1x32x256xbf16>
    tpu.vector_store %arg4[%c0_13, %c0_14, %c0_15], %36 {strides = array<i32>} : memref<1x32x256xbf16, #tpu.memory_space<vmem>>, vector<1x32x256xbf16>,
    %37 = vector.extract_strided_slice %32 {offsets = [32, 0], sizes = [32, 256], strides = [1, 1]} : vector<96x256xbf16> to vector<32x256xbf16>
    %c0_16 = arith.constant 0 : index
    %c0_17 = arith.constant 0 : index
    %c0_18 = arith.constant 0 : index
    %38 = vector.load %arg5[%c0_16, %c0_17, %c0_18] : memref<1x32x256xbf16, #tpu.memory_space<vmem>>, vector<1x32x256xbf16>
    %39 = vector.shape_cast %38 : vector<1x32x256xbf16> to vector<32x256xbf16>
    %40 = vector.shape_cast %37 : vector<32x256xbf16> to vector<1x32x256xbf16>
    tpu.vector_store %arg5[%c0_16, %c0_17, %c0_18], %40 {strides = array<i32>} : memref<1x32x256xbf16, #tpu.memory_space<vmem>>, vector<1x32x256xbf16>,
    %41 = vector.extract_strided_slice %32 {offsets = [64, 0], sizes = [32, 256], strides = [1, 1]} : vector<96x256xbf16> to vector<32x256xbf16>
    %c0_19 = arith.constant 0 : index
    %c0_20 = arith.constant 0 : index
    %c0_21 = arith.constant 0 : index
    %42 = vector.load %arg6[%c0_19, %c0_20, %c0_21] : memref<1x32x256xbf16, #tpu.memory_space<vmem>>, vector<1x32x256xbf16>
    %43 = vector.shape_cast %42 : vector<1x32x256xbf16> to vector<32x256xbf16>
    %44 = vector.shape_cast %41 : vector<32x256xbf16> to vector<1x32x256xbf16>
    tpu.vector_store %arg6[%c0_19, %c0_20, %c0_21], %44 {strides = array<i32>} : memref<1x32x256xbf16, #tpu.memory_space<vmem>>, vector<1x32x256xbf16>,
    return
  }
  func.func @transform_0(%arg0: i32) -> (i32, i32, i32) {
    %c0_i32 = arith.constant 0 : i32
    %c0_i32_0 = arith.constant 0 : i32
    %c0_i32_1 = arith.constant 0 : i32
    return %arg0, %c0_i32, %c0_i32_0 : i32, i32, i32
  }
  func.func @transform_1(%arg0: i32) -> (i32, i32) {
    %c0_i32 = arith.constant 0 : i32
    %c0_i32_0 = arith.constant 0 : i32
    %c0_i32_1 = arith.constant 0 : i32
    return %c0_i32, %c0_i32_0 : i32, i32
  }
  func.func @transform_2(%arg0: i32) -> (i32, i32) {
    %c0_i32 = arith.constant 0 : i32
    %c0_i32_0 = arith.constant 0 : i32
    %c0_i32_1 = arith.constant 0 : i32
    return %c0_i32, %c0_i32_0 : i32, i32
  }
  func.func @transform_3(%arg0: i32) -> (i32, i32, i32) {
    %c0_i32 = arith.constant 0 : i32
    %c0_i32_0 = arith.constant 0 : i32
    %c0_i32_1 = arith.constant 0 : i32
    return %arg0, %c0_i32, %c0_i32_0 : i32, i32, i32
  }
  func.func @transform_4(%arg0: i32) -> (i32, i32, i32) {
    %c0_i32 = arith.constant 0 : i32
    %c0_i32_0 = arith.constant 0 : i32
    %c0_i32_1 = arith.constant 0 : i32
    return %arg0, %c0_i32, %c0_i32_0 : i32, i32, i32
  }
  func.func @transform_5(%arg0: i32) -> (i32, i32, i32) {
    %c0_i32 = arith.constant 0 : i32
    %c0_i32_0 = arith.constant 0 : i32
    %c0_i32_1 = arith.constant 0 : i32
    return %arg0, %c0_i32, %c0_i32_0 : i32, i32, i32
  }
}

</mosaic_0001>

<llo_original>
// kernel: tpu_custom_call.1
$region0: #{tpu_custom_call.1}
  #allocation0 [shape = 'u32[]', space=smem, size = 0x4, offset = 0x4, fixed_abs, tag = 'smem constant byte address 0x4 - core index']
  #allocation1 [shape = 'u32[72,128]{1,0:T(1,128)}', space=vmem, size = 0x9000, scoped, tag = 'internal scratch']
  %s0 = inlined_call_operand.vmem [shape: f32[2,32,256], index: 0, kind: input, shape index: {}]
  %s1 = inlined_call_operand.vmem [shape: bf16[96,32], index: 1, kind: input, shape index: {}]
  %s2 = inlined_call_operand.vmem [shape: f32[96,1], index: 2, kind: input, shape index: {}]
  %s3 = inlined_call_operand.hbm [shape: bf16[2,32,256], index: 3, kind: output, shape index: {0}]
  %s4 = inlined_call_operand.hbm [shape: bf16[2,32,256], index: 4, kind: output, shape index: {1}]
  %s5 = inlined_call_operand.hbm [shape: bf16[2,32,256], index: 5, kind: output, shape index: {2}]
  %6 = xla_tuple %s3, %s4, %s5
  %s7 = sld [smem:[#allocation0]]
  $region61: #{tpu_custom_call.1} parent=0
    _
  %s9 = ssub.s32 1, %s7
  %s10 = scalar_select 0, %s9, %s7
  $region1: #{tpu_custom_call.1} parent=0
    #allocation2 [shape = 'u8[32768]{0}', space=vmem, size = 0x8000, scoped, tag = 'output window, operand 0']
    #allocation3 [shape = 's32[2]{0}', space=sflag, size = 0x8, scoped, tag = 'scoped memory for tpu_custom_call.1']
    #allocation4 [shape = 'u8[32768]{0}', space=vmem, size = 0x8000, scoped, tag = 'output window, operand 1']
    #allocation5 [shape = 's32[2]{0}', space=sflag, size = 0x8, scoped, tag = 'scoped memory for tpu_custom_call.1']
    #allocation6 [shape = 'u8[32768]{0}', space=vmem, size = 0x8000, scoped, tag = 'output window, operand 2']
    %11 = vsyncpa [#allocation3], 0
    %s12 = scalar_lea.sflag [#allocation3], 1
    %13 = vsyncpa %s12, 0
    %14 = vsyncpa [#allocation5], 0
    %s15 = scalar_lea.sflag [#allocation5], 1
    %16 = vsyncpa %s15, 0
    loop: start=0, step=1, limit=4
    $region2: #{tpu_custom_call.1} parent=1 // loop_pre_header
      _
    $region3: #{tpu_custom_call.1} parent=1 // loop_header
      %s18 = sphi 0, %s22
      %p19 = scmp.ge.s32.totalorder %s18, 4
      %s28 = sphi 0, %s30
      %s31 = sphi 0, %s28
      %s32 = sphi 0, %s31
      %s48 = sphi 0, %s32
      %s52 = sphi 0, %s52
      %s54 = sphi 0, %s52
      %s55 = sphi 0, %s54
      %s69 = sphi 0, %s55
      %s73 = sphi 0, %s73
      %s75 = sphi 0, %s73
      %s76 = sphi 0, %s75
      %s90 = sphi 0, %s76
      %s96 = sphi 0, %s98
      %s99 = sphi 0, %s96
      %s100 = sphi 0, %s99
      %s116 = sphi 0, %s100
      %s122 = sphi 0, %s124
      %s125 = sphi 0, %s122
      %s126 = sphi 0, %s125
      %s142 = sphi 0, %s126
      %s148 = sphi 0, %s150
      %s151 = sphi 0, %s148
      %s152 = sphi 0, %s151
      %s168 = sphi 0, %s152
    $region4: #{tpu_custom_call.1} parent=1 // loop_header_branch
      %21 = sbr.rel (%p19) target = $region8
    $region5: #{tpu_custom_call.1} parent=1 // loop_body
      %s23 = ssub.s32 %s18, 1
      %s24 = ssub.s32 %s18, 2
      %s25 = sadd.s32 %s18, 1
      %s26 = ssub.s32 %s18, %s25
      %p27 = scmp.eq.s32.totalorder %s26, 0
      %s29 = sadd.s32 %s28, 1
      %s30 = scalar_select %p27, %s28, %s29
      %p33 = pneg %p27
      %p34 = scmp.eq.s32.totalorder %s18, 1
      %p35 = por %p33, %p34
      %p36 = scmp.ne.s32.totalorder %s28, %s31
      %p37 = scmp.eq.s32.totalorder %s18, 0
      %p38 = por %p36, %p37
      %p39 = scmp.ne.s32.totalorder %s28, %s31
      %p40 = scmp.eq.s32.totalorder %s23, 1
      %p41 = por %p39, %p40
      %p42 = scmp.ne.s32.totalorder %s31, %s32
      %p43 = scmp.eq.s32.totalorder %s23, 0
      %p44 = por %p42, %p43
      %p45 = scmp.ne.s32.totalorder %s31, %s32
      %p46 = scmp.eq.s32.totalorder %s24, 1
      %p47 = por %p45, %p46
      %p49 = scmp.ne.s32.totalorder %s32, %s48
      %p50 = scmp.eq.s32.totalorder %s24, 0
      %p51 = por %p49, %p50
      %s53 = sadd.s32 %s52, 1
      %p56 = scmp.eq.s32.totalorder %s18, 1
      %p57 = scmp.ne.s32.totalorder %s52, %s54
      %p58 = scmp.eq.s32.totalorder %s18, 0
      %p59 = por %p57, %p58
      %p60 = scmp.ne.s32.totalorder %s52, %s54
      %p61 = scmp.eq.s32.totalorder %s23, 1
      %p62 = por %p60, %p61
      %p63 = scmp.ne.s32.totalorder %s54, %s55
      %p64 = scmp.eq.s32.totalorder %s23, 0
      %p65 = por %p63, %p64
      %p66 = scmp.ne.s32.totalorder %s54, %s55
      %p67 = scmp.eq.s32.totalorder %s24, 1
      %p68 = por %p66, %p67
      %p70 = scmp.ne.s32.totalorder %s55, %s69
      %p71 = scmp.eq.s32.totalorder %s24, 0
      %p72 = por %p70, %p71
      %s74 = sadd.s32 %s73, 1
      %p77 = scmp.eq.s32.totalorder %s18, 1
      %p78 = scmp.ne.s32.totalorder %s73, %s75
      %p79 = scmp.eq.s32.totalorder %s18, 0
      %p80 = por %p78, %p79
      %p81 = scmp.ne.s32.totalorder %s73, %s75
      %p82 = scmp.eq.s32.totalorder %s23, 1
      %p83 = por %p81, %p82
      %p84 = scmp.ne.s32.totalorder %s75, %s76
      %p85 = scmp.eq.s32.totalorder %s23, 0
      %p86 = por %p84, %p85
      %p87 = scmp.ne.s32.totalorder %s75, %s76
      %p88 = scmp.eq.s32.totalorder %s24, 1
      %p89 = por %p87, %p88
      %p91 = scmp.ne.s32.totalorder %s76, %s90
      %p92 = scmp.eq.s32.totalorder %s24, 0
      %p93 = por %p91, %p92
      %s94 = ssub.s32 %s18, %s25
      %p95 = scmp.eq.s32.totalorder %s94, 0
      %s97 = sadd.s32 %s96, 1
      %s98 = scalar_select %p95, %s96, %s97
      %p101 = pneg %p95
      %p102 = scmp.eq.s32.totalorder %s18, 1
      %p103 = por %p101, %p102
      %p104 = scmp.ne.s32.totalorder %s96, %s99
      %p105 = scmp.eq.s32.totalorder %s18, 0
      %p106 = por %p104, %p105
      %p107 = scmp.ne.s32.totalorder %s96, %s99
      %p108 = scmp.eq.s32.totalorder %s23, 1
      %p109 = por %p107, %p108
      %p110 = scmp.ne.s32.totalorder %s99, %s100
      %p111 = scmp.eq.s32.totalorder %s23, 0
      %p112 = por %p110, %p111
      %p113 = scmp.ne.s32.totalorder %s99, %s100
      %p114 = scmp.eq.s32.totalorder %s24, 1
      %p115 = por %p113, %p114
      %p117 = scmp.ne.s32.totalorder %s100, %s116
      %p118 = scmp.eq.s32.totalorder %s24, 0
      %p119 = por %p117, %p118
      %s120 = ssub.s32 %s18, %s25
      %p121 = scmp.eq.s32.totalorder %s120, 0
      %s123 = sadd.s32 %s122, 1
      %s124 = scalar_select %p121, %s122, %s123
      %p127 = pneg %p121
      %p128 = scmp.eq.s32.totalorder %s18, 1
      %p129 = por %p127, %p128
      %p130 = scmp.ne.s32.totalorder %s122, %s125
      %p131 = scmp.eq.s32.totalorder %s18, 0
      %p132 = por %p130, %p131
      %p133 = scmp.ne.s32.totalorder %s122, %s125
      %p134 = scmp.eq.s32.totalorder %s23, 1
      %p135 = por %p133, %p134
      %p136 = scmp.ne.s32.totalorder %s125, %s126
      %p137 = scmp.eq.s32.totalorder %s23, 0
      %p138 = por %p136, %p137
      %p139 = scmp.ne.s32.totalorder %s125, %s126
      %p140 = scmp.eq.s32.totalorder %s24, 1
      %p141 = por %p139, %p140
      %p143 = scmp.ne.s32.totalorder %s126, %s142
      %p144 = scmp.eq.s32.totalorder %s24, 0
      %p145 = por %p143, %p144
      %s146 = ssub.s32 %s18, %s25
      %p147 = scmp.eq.s32.totalorder %s146, 0
      %s149 = sadd.s32 %s148, 1
      %s150 = scalar_select %p147, %s148, %s149
      %p153 = pneg %p147
      %p154 = scmp.eq.s32.totalorder %s18, 1
      %p155 = por %p153, %p154
      %p156 = scmp.ne.s32.totalorder %s148, %s151
      %p157 = scmp.eq.s32.totalorder %s18, 0
      %p158 = por %p156, %p157
      %p159 = scmp.ne.s32.totalorder %s148, %s151
      %p160 = scmp.eq.s32.totalorder %s23, 1
      %p161 = por %p159, %p160
      %p162 = scmp.ne.s32.totalorder %s151, %s152
      %p163 = scmp.eq.s32.totalorder %s23, 0
      %p164 = por %p162, %p163
      %p165 = scmp.ne.s32.totalorder %s151, %s152
      %p166 = scmp.eq.s32.totalorder %s24, 1
      %p167 = por %p165, %p166
      %p169 = scmp.ne.s32.totalorder %s152, %s168
      %p170 = scmp.eq.s32.totalorder %s24, 0
      %p171 = por %p169, %p170
      %p172 = scmp.le.s32.totalorder 1, %s18
      %p173 = scmp.lt.s32.totalorder %s18, 3
      %p174 = pnand %p172, %p173
      %p175 = pneg %p174
      // Predicated region
      $region9: #{tpu_custom_call.1} parent=5 // pred_check
        _
      $region10: #{tpu_custom_call.1} parent=5 // pred_check_branch
        %177 = sbr.rel (%p174) target = $region12
      $region11: #{tpu_custom_call.1} parent=5 // pred_region
        %s178 = ssub.s32 %s18, 1
        // Predicated region
        $region13: #{tpu_custom_call.1} parent=11 // pred_check
          %p179 = pneg %p65
        $region14: #{tpu_custom_call.1} parent=11 // pred_check_branch
          %181 = sbr.rel (%p179) target = $region16
        $region15: #{tpu_custom_call.1} parent=11 // pred_region
          _
        $region16: #{tpu_custom_call.1} parent=11 // pred_fallthru
          _
        // Predicated region
        $region17: #{tpu_custom_call.1} parent=11 // pred_check
          %p182 = pneg %p86
        $region18: #{tpu_custom_call.1} parent=11 // pred_check_branch
          %184 = sbr.rel (%p182) target = $region20
        $region19: #{tpu_custom_call.1} parent=11 // pred_region
          _
        $region20: #{tpu_custom_call.1} parent=11 // pred_fallthru
          _
      $region12: #{tpu_custom_call.1} parent=5 // pred_fallthru
        _
      %p185 = scmp.lt.s32.totalorder %s18, 2
      // Predicated region
      $region21: #{tpu_custom_call.1} parent=5 // pred_check
        %p186 = pneg %p185
      $region22: #{tpu_custom_call.1} parent=5 // pred_check_branch
        %188 = sbr.rel (%p186) target = $region24
      $region23: #{tpu_custom_call.1} parent=5 // pred_region
        // Predicated region
        $region25: #{tpu_custom_call.1} parent=23 // pred_check
          %p189 = pneg %p38
        $region26: #{tpu_custom_call.1} parent=23 // pred_check_branch
          %191 = sbr.rel (%p189) target = $region28
        $region27: #{tpu_custom_call.1} parent=23 // pred_region
          %p192 = scmp.lt.s32.totalorder %s18, 1
          %s193 = scalar_select %p192, %s18, 1
          %s194 = smul.addr %s193, 8
          %s195 = smul.addr %s194, 8
          %s196 = scalar_lea.vmem %s0, %s195
        $region28: #{tpu_custom_call.1} parent=23 // pred_fallthru
          _
      $region24: #{tpu_custom_call.1} parent=5 // pred_fallthru
        _
      %p197 = scmp.le.s32.totalorder 1, %s18
      %p198 = scmp.lt.s32.totalorder %s18, 3
      %p199 = pnand %p197, %p198
      %p200 = pneg %p199
      // Predicated region
      $region29: #{tpu_custom_call.1} parent=5 // pred_check
        _
      $region30: #{tpu_custom_call.1} parent=5 // pred_check_branch
        %202 = sbr.rel (%p199) target = $region32
      $region31: #{tpu_custom_call.1} parent=5 // pred_region
        %s203 = ssub.s32 %s18, 1
        %p204 = scmp.lt.s32.totalorder %s23, 1
        %s205 = scalar_select %p204, %s23, 1
        %s206 = smul.addr %s205, 8
        %s207 = smul.addr %s206, 8
        %s208 = scalar_lea.vmem %s0, %s207
        %p209 = pneg %p44
        %p210 = pneg %p41
        %p211 = pneg %p65
        %p212 = pneg %p62
        %p213 = pneg %p86
        %p214 = pneg %p83
        %p215 = pneg %p112
        %p216 = pneg %p109
        %s217 = sand.u32 %s99, 1
        %s218 = scalar_lea.sflag [#allocation3], %s217
        %s219 = sand.u32 %s99, 1
        %s220 = smul.addr %s219, 32
        %s221 = scalar_lea.vmem [#allocation2], %s220
        %p222 = pneg %p138
        %p223 = pneg %p135
        %s224 = sand.u32 %s23, 1
        %s225 = scalar_lea.sflag [#allocation5], %s224
        %s226 = sand.u32 %s125, 1
        %s227 = smul.addr %s226, 32
        %s228 = scalar_lea.vmem [#allocation4], %s227
        %p229 = pneg %p164
        %p230 = pneg %p161
        %s231 = sand.u32 %s23, 1
        %s232 = scalar_lea.sflag [#allocation5], %s231
        %s233 = sand.u32 %s151, 1
        %s234 = smul.addr %s233, 32
        %s235 = scalar_lea.vmem [#allocation6], %s234
        %p236 = scmp.lt.s32.totalorder %s23, 1
        %s237 = scalar_select %p236, %s23, 1
        %s238 = smul.addr %s237, 8
        %s239 = smul.addr %s238, 8
        %s240 = scalar_lea.vmem %s0, %s239
        %v242 = vld [vmem:[%s240] sm:$0xff]
        %v243 = vld [vmem:[%s240 + $0x8] sm:$0xff]
        %v244 = vld [vmem:[%s240 + $0x10] sm:$0xff]
        %v245 = vld [vmem:[%s240 + $0x18] sm:$0xff]
        %v246 = vld [vmem:[%s240 + $0x20] sm:$0xff]
        %v247 = vld [vmem:[%s240 + $0x28] sm:$0xff]
        %v248 = vld [vmem:[%s240 + $0x30] sm:$0xff]
        %v249 = vld [vmem:[%s240 + $0x38] sm:$0xff]
        %v250 = vadd.f32 %v242, %v243
        %251 = vadd.xlane.f32.xlu0 %v250
        %v252 = vpop.xlane.xlu0 %251
        %v253 = vadd.f32 %v244, %v245
        %254 = vadd.xlane.f32.xlu0 %v253
        %v255 = vpop.xlane.xlu0 %254
        %v256 = vadd.f32 %v246, %v247
        %257 = vadd.xlane.f32.xlu0 %v256
        %v258 = vpop.xlane.xlu0 %257
        %v259 = vadd.f32 %v248, %v249
        %260 = vadd.xlane.f32.xlu0 %v259
        %v261 = vpop.xlane.xlu0 %260
        %v262 = vrot.slane %v252, 4
        %v263 = vadd.f32 %v252, %v262
        %v264 = vrot.slane %v263, 2
        %v265 = vadd.f32 %v263, %v264
        %v266 = vrot.slane %v265, 1
        %v267 = vadd.f32 %v265, %v266
        %v268 = vrot.slane %v255, 4
        %v269 = vadd.f32 %v255, %v268
        %v270 = vrot.slane %v269, 2
        %v271 = vadd.f32 %v269, %v270
        %v272 = vrot.slane %v271, 1
        %v273 = vadd.f32 %v271, %v272
        %v274 = vrot.slane %v258, 4
        %v275 = vadd.f32 %v258, %v274
        %v276 = vrot.slane %v275, 2
        %v277 = vadd.f32 %v275, %v276
        %v278 = vrot.slane %v277, 1
        %v279 = vadd.f32 %v277, %v278
        %v280 = vrot.slane %v261, 4
        %v281 = vadd.f32 %v261, %v280
        %v282 = vrot.slane %v281, 2
        %v283 = vadd.f32 %v281, %v282
        %v284 = vrot.slane %v283, 1
        %v285 = vadd.f32 %v283, %v284
        %v286 = vmul.f32 %v242, %v242
        %v287 = vmul.f32 %v243, %v243
        %v288 = vmul.f32 %v244, %v244
        %v289 = vmul.f32 %v245, %v245
        %v290 = vmul.f32 %v246, %v246
        %v291 = vmul.f32 %v247, %v247
        %v292 = vmul.f32 %v248, %v248
        %v293 = vmul.f32 %v249, %v249
        %v294 = vadd.f32 %v286, %v287
        %295 = vadd.xlane.f32.xlu0 %v294
        %v296 = vpop.xlane.xlu0 %295
        %v297 = vadd.f32 %v288, %v289
        %298 = vadd.xlane.f32.xlu0 %v297
        %v299 = vpop.xlane.xlu0 %298
        %v300 = vadd.f32 %v290, %v291
        %301 = vadd.xlane.f32.xlu0 %v300
        %v302 = vpop.xlane.xlu0 %301
        %v303 = vadd.f32 %v292, %v293
        %304 = vadd.xlane.f32.xlu0 %v303
        %v305 = vpop.xlane.xlu0 %304
        %v306 = vrot.slane %v296, 4
        %v307 = vadd.f32 %v296, %v306
        %v308 = vrot.slane %v307, 2
        %v309 = vadd.f32 %v307, %v308
        %v310 = vrot.slane %v309, 1
        %v311 = vadd.f32 %v309, %v310
        %v312 = vrot.slane %v299, 4
        %v313 = vadd.f32 %v299, %v312
        %v314 = vrot.slane %v313, 2
        %v315 = vadd.f32 %v313, %v314
        %v316 = vrot.slane %v315, 1
        %v317 = vadd.f32 %v315, %v316
        %v318 = vrot.slane %v302, 4
        %v319 = vadd.f32 %v302, %v318
        %v320 = vrot.slane %v319, 2
        %v321 = vadd.f32 %v319, %v320
        %v322 = vrot.slane %v321, 1
        %v323 = vadd.f32 %v321, %v322
        %v324 = vrot.slane %v305, 4
        %v325 = vadd.f32 %v305, %v324
        %v326 = vrot.slane %v325, 2
        %v327 = vadd.f32 %v325, %v326
        %v328 = vrot.slane %v327, 1
        %v329 = vadd.f32 %v327, %v328
        %v330 = vrcp.pop 2048.0
        %v331 = vmul.f32 2048.0, %v330
        %v332 = vsub.f32 1.0, %v331
        %v333 = vmul.f32 %v330, %v332
        %v334 = vadd.f32 %v330, %v333
        %vm335 = vweird.f32 %v330
        %v336 = vsel %vm335, %v330, %v334
        %v337 = vmul.f32 %v267, %v336
        %v338 = vmul.f32 %v273, %v336
        %v339 = vmul.f32 %v279, %v336
        %v340 = vmul.f32 %v285, %v336
        %v341 = vmul.f32 %v311, %v336
        %v342 = vmul.f32 %v317, %v336
        %v343 = vmul.f32 %v323, %v336
        %v344 = vmul.f32 %v329, %v336
        %v345 = vmul.f32 %v337, %v337
        %v346 = vmul.f32 %v338, %v338
        %v347 = vmul.f32 %v339, %v339
        %v348 = vmul.f32 %v340, %v340
        %v349 = vsub.f32 %v341, %v345
        %v350 = vsub.f32 %v342, %v346
        %v351 = vsub.f32 %v343, %v347
        %v352 = vsub.f32 %v344, %v348
        %v353 = vsub.f32 %v242, %v337
        %v354 = vsub.f32 %v243, %v337
        %v355 = vsub.f32 %v244, %v338
        %v356 = vsub.f32 %v245, %v338
        %v357 = vsub.f32 %v246, %v339
        %v358 = vsub.f32 %v247, %v339
        %v359 = vsub.f32 %v248, %v340
        %v360 = vsub.f32 %v249, %v340
        %v361 = vadd.f32 %v349, 1e-05
        %v362 = vadd.f32 %v350, 1e-05
        %v363 = vadd.f32 %v351, 1e-05
        %v364 = vadd.f32 %v352, 1e-05
        %v365 = vrsqrt.pop %v361
        %v366 = vmul.f32 %v365, %v361
        %v367 = vmul.f32 %v366, %v365
        %v368 = vmul.f32 0.5, %v367
        %v369 = vsub.f32 1.5, %v368
        %v370 = vmul.f32 %v365, %v369
        %vm371 = vweird.f32 %v361
        %vm372 = vweird.f32 %v365
        %vm373 = vmor %vm371, %vm372
        %v374 = vsel %vm373, %v365, %v370
        %v375 = vrsqrt.pop %v362
        %v376 = vmul.f32 %v375, %v362
        %v377 = vmul.f32 %v376, %v375
        %v378 = vmul.f32 0.5, %v377
        %v379 = vsub.f32 1.5, %v378
        %v380 = vmul.f32 %v375, %v379
        %vm381 = vweird.f32 %v362
        %vm382 = vweird.f32 %v375
        %vm383 = vmor %vm381, %vm382
        %v384 = vsel %vm383, %v375, %v380
        %v385 = vrsqrt.pop %v363
        %v386 = vmul.f32 %v385, %v363
        %v387 = vmul.f32 %v386, %v385
        %v388 = vmul.f32 0.5, %v387
        %v389 = vsub.f32 1.5, %v388
        %v390 = vmul.f32 %v385, %v389
        %vm391 = vweird.f32 %v363
        %vm392 = vweird.f32 %v385
        %vm393 = vmor %vm391, %vm392
        %v394 = vsel %vm393, %v385, %v390
        %v395 = vrsqrt.pop %v364
        %v396 = vmul.f32 %v395, %v364
        %v397 = vmul.f32 %v396, %v395
        %v398 = vmul.f32 0.5, %v397
        %v399 = vsub.f32 1.5, %v398
        %v400 = vmul.f32 %v395, %v399
        %vm401 = vweird.f32 %v364
        %vm402 = vweird.f32 %v395
        %vm403 = vmor %vm401, %vm402
        %v404 = vsel %vm403, %v395, %v400
        %v405 = vmul.f32 %v353, %v374
        %v406 = vmul.f32 %v354, %v374
        %v407 = vmul.f32 %v355, %v384
        %v408 = vmul.f32 %v356, %v384
        %v409 = vmul.f32 %v357, %v394
        %v410 = vmul.f32 %v358, %v394
        %v411 = vmul.f32 %v359, %v404
        %v412 = vmul.f32 %v360, %v404
        %v413 = vld [vmem:[%s1] sm:$0xf]
        %v414 = vld [vmem:[%s1 + $0x4] sm:$0xf]
        %v415 = vld [vmem:[%s1 + $0x8] sm:$0xf]
        %v416 = vld [vmem:[%s1 + $0xc] sm:$0xf]
        %v417 = vld [vmem:[%s1 + $0x10] sm:$0xf]
        %v418 = vld [vmem:[%s1 + $0x14] sm:$0xf]
        %v419 = vld [vmem:[%s1 + $0x18] sm:$0xf]
        %v420 = vld [vmem:[%s1 + $0x1c] sm:$0xf]
        %v421 = vld [vmem:[%s1 + $0x20] sm:$0xf]
        %v422 = vld [vmem:[%s1 + $0x24] sm:$0xf]
        %v423 = vld [vmem:[%s1 + $0x28] sm:$0xf]
        %v424 = vld [vmem:[%s1 + $0x2c] sm:$0xf]
        %v425 = vpack.c.bf16 %v407, %v405
        %v426 = vpack.c.bf16 %v408, %v406
        %v427 = vpack.c.bf16 %v411, %v409
        %v428 = vpack.c.bf16 %v412, %v410
        %v429 = vld [vmem:[%s2] sm:$0xff]
        %v430 = vld [vmem:[%s2 + $0x8] sm:$0xff]
        %v431 = vld [vmem:[%s2 + $0x10] sm:$0xff]
        %v432 = vld [vmem:[%s2 + $0x18] sm:$0xff]
        %v433 = vld [vmem:[%s2 + $0x20] sm:$0xff]
        %v434 = vld [vmem:[%s2 + $0x28] sm:$0xff]
        %v435 = vld [vmem:[%s2 + $0x30] sm:$0xff]
        %v436 = vld [vmem:[%s2 + $0x38] sm:$0xff]
        %v437 = vld [vmem:[%s2 + $0x40] sm:$0xff]
        %v438 = vld [vmem:[%s2 + $0x48] sm:$0xff]
        %v439 = vld [vmem:[%s2 + $0x50] sm:$0xff]
        %v440 = vld [vmem:[%s2 + $0x58] sm:$0xff]
        %442 = vset.pattern.permute.xlu0 0
        %443 = vperm.xlu0 %442, %v429
        %v444 = vpop.permute.xlu0 %443
        %447 = vset.pattern.permute.xlu0 0
        %448 = vperm.xlu0 %447, %v430
        %v449 = vpop.permute.xlu0 %448
        %452 = vset.pattern.permute.xlu0 0
        %453 = vperm.xlu0 %452, %v431
        %v454 = vpop.permute.xlu0 %453
        %457 = vset.pattern.permute.xlu0 0
        %458 = vperm.xlu0 %457, %v432
        %v459 = vpop.permute.xlu0 %458
        %462 = vset.pattern.permute.xlu0 0
        %463 = vperm.xlu0 %462, %v433
        %v464 = vpop.permute.xlu0 %463
        %467 = vset.pattern.permute.xlu0 0
        %468 = vperm.xlu0 %467, %v434
        %v469 = vpop.permute.xlu0 %468
        %472 = vset.pattern.permute.xlu0 0
        %473 = vperm.xlu0 %472, %v435
        %v474 = vpop.permute.xlu0 %473
        %477 = vset.pattern.permute.xlu0 0
        %478 = vperm.xlu0 %477, %v436
        %v479 = vpop.permute.xlu0 %478
        %482 = vset.pattern.permute.xlu0 0
        %483 = vperm.xlu0 %482, %v437
        %v484 = vpop.permute.xlu0 %483
        %487 = vset.pattern.permute.xlu0 0
        %488 = vperm.xlu0 %487, %v438
        %v489 = vpop.permute.xlu0 %488
        %492 = vset.pattern.permute.xlu0 0
        %493 = vperm.xlu0 %492, %v439
        %v494 = vpop.permute.xlu0 %493
        %497 = vset.pattern.permute.xlu0 0
        %498 = vperm.xlu0 %497, %v440
        %v499 = vpop.permute.xlu0 %498
        %v513 = vunpack.c.l.b16 %v413
        %v514 = vunpack.c.l.b16 %v414
        %v515 = vunpack.c.l.b16 %v415
        %v516 = vunpack.c.l.b16 %v416
        %v517 = vunpack.c.l.b16 %v417
        %v518 = vunpack.c.l.b16 %v418
        %v519 = vunpack.c.l.b16 %v419
        %v520 = vunpack.c.l.b16 %v420
        %v521 = vunpack.c.l.b16 %v421
        %v522 = vunpack.c.l.b16 %v422
        %v523 = vunpack.c.l.b16 %v423
        %v524 = vunpack.c.l.b16 %v424
        %v525 = vpack.c.b16 %v514, %v513
        %v526 = vpack.c.b16 %v516, %v515
        %v527 = vpack.c.b16 %v518, %v517
        %v528 = vpack.c.b16 %v520, %v519
        %v529 = vpack.c.b16 %v522, %v521
        %v530 = vpack.c.b16 %v524, %v523
        %vm531 = vcmask 261120
        %v533 = vsel %vm531, %v525, 0
        %v536 = vsel %vm531, %v526, 0
        %v539 = vsel %vm531, %v527, 0
        %v542 = vsel %vm531, %v528, 0
        %v545 = vsel %vm531, %v529, 0
        %v548 = vsel %vm531, %v530, 0
        %550 = vmatpush.bf16.msra.mxu0 0
        %551 = vmatpush.bf16.msra.mxu0 0
        %552 = vmatpush.bf16.msra.mxu0 0
        %553 = vmatpush.bf16.msra.mxu0 0
        %554 = vmatpush.bf16.msra.mxu0 0
        %555 = vmatpush.bf16.msra.mxu0 0
        %556 = vmatpush.bf16.msra.mxu0 %v427
        %557 = vmatpush.bf16.msra.mxu0 %v425
        %558 = vmatmul.bf16.gmra.mxu0 %v533
        %v559 = vpop.f32.mrf.mxu0
        %v560 = vadd.f32 %v444, %v559
        %v561 = vpop.f32.mrf.mxu0
        %v562 = vadd.f32 %v449, %v561
        %563 = vmatmul.bf16.gmra.mxu0 %v536
        %v564 = vpop.f32.mrf.mxu0
        %v565 = vadd.f32 %v454, %v564
        %v566 = vpop.f32.mrf.mxu0
        %v567 = vadd.f32 %v459, %v566
        %568 = vmatmul.bf16.gmra.mxu0 %v539
        %v569 = vpop.f32.mrf.mxu0
        %v570 = vadd.f32 %v464, %v569
        %v571 = vpop.f32.mrf.mxu0
        %v572 = vadd.f32 %v469, %v571
        %573 = vmatmul.bf16.gmra.mxu0 %v542
        %v574 = vpop.f32.mrf.mxu0
        %v575 = vadd.f32 %v474, %v574
        %v576 = vpop.f32.mrf.mxu0
        %v577 = vadd.f32 %v479, %v576
        %578 = vmatmul.bf16.gmra.mxu0 %v545
        %v579 = vpop.f32.mrf.mxu0
        %v580 = vadd.f32 %v484, %v579
        %v581 = vpop.f32.mrf.mxu0
        %v582 = vadd.f32 %v489, %v581
        %583 = vmatmul.bf16.gmra.mxu0 %v548
        %v584 = vpop.f32.mrf.mxu0
        %v585 = vadd.f32 %v494, %v584
        %v586 = vpop.f32.mrf.mxu0
        %v587 = vadd.f32 %v499, %v586
        %588 = vdwg.mxu0
        %589 = vmatpush.bf16.msra.mxu0 0
        %590 = vmatpush.bf16.msra.mxu0 0
        %591 = vmatpush.bf16.msra.mxu0 0
        %592 = vmatpush.bf16.msra.mxu0 0
        %593 = vmatpush.bf16.msra.mxu0 0
        %594 = vmatpush.bf16.msra.mxu0 0
        %595 = vmatpush.bf16.msra.mxu0 %v428
        %596 = vmatpush.bf16.msra.mxu0 %v426
        %597 = vmatmul.bf16.gmra.mxu0 %v533
        %v598 = vpop.f32.mrf.mxu0
        %v599 = vadd.f32 %v444, %v598
        %v600 = vpop.f32.mrf.mxu0
        %v601 = vadd.f32 %v449, %v600
        %602 = vmatmul.bf16.gmra.mxu0 %v536
        %v603 = vpop.f32.mrf.mxu0
        %v604 = vadd.f32 %v454, %v603
        %v605 = vpop.f32.mrf.mxu0
        %v606 = vadd.f32 %v459, %v605
        %607 = vmatmul.bf16.gmra.mxu0 %v539
        %v608 = vpop.f32.mrf.mxu0
        %v609 = vadd.f32 %v464, %v608
        %v610 = vpop.f32.mrf.mxu0
        %v611 = vadd.f32 %v469, %v610
        %612 = vmatmul.bf16.gmra.mxu0 %v542
        %v613 = vpop.f32.mrf.mxu0
        %v614 = vadd.f32 %v474, %v613
        %v615 = vpop.f32.mrf.mxu0
        %v616 = vadd.f32 %v479, %v615
        %617 = vmatmul.bf16.gmra.mxu0 %v545
        %v618 = vpop.f32.mrf.mxu0
        %v619 = vadd.f32 %v484, %v618
        %v620 = vpop.f32.mrf.mxu0
        %v621 = vadd.f32 %v489, %v620
        %622 = vmatmul.bf16.gmra.mxu0 %v548
        %v623 = vpop.f32.mrf.mxu0
        %v624 = vadd.f32 %v494, %v623
        %v625 = vpop.f32.mrf.mxu0
        %v626 = vadd.f32 %v499, %v625
        %627 = vdwg.mxu0
        %v628 = vpack.c.bf16 %v599, %v560
        %v629 = vpack.c.bf16 %v601, %v562
        %v630 = vpack.c.bf16 %v604, %v565
        %v631 = vpack.c.bf16 %v606, %v567
        %v632 = vpack.c.bf16 %v609, %v570
        %v633 = vpack.c.bf16 %v611, %v572
        %v634 = vpack.c.bf16 %v614, %v575
        %v635 = vpack.c.bf16 %v616, %v577
        %v636 = vpack.c.bf16 %v619, %v580
        %v637 = vpack.c.bf16 %v621, %v582
        %v638 = vpack.c.bf16 %v624, %v585
        %v639 = vpack.c.bf16 %v626, %v587
        %640 = vst [vmem:[%s221] sm:$0xff] %v628
        %641 = vst [vmem:[%s221 + $0x8] sm:$0xff] %v629
        %642 = vst [vmem:[%s221 + $0x10] sm:$0xff] %v630
        %643 = vst [vmem:[%s221 + $0x18] sm:$0xff] %v631
        %644 = vst [vmem:[%s228] sm:$0xff] %v632
        %645 = vst [vmem:[%s228 + $0x8] sm:$0xff] %v633
        %646 = vst [vmem:[%s228 + $0x10] sm:$0xff] %v634
        %647 = vst [vmem:[%s228 + $0x18] sm:$0xff] %v635
        %648 = vst [vmem:[%s235] sm:$0xff] %v636
        %649 = vst [vmem:[%s235 + $0x8] sm:$0xff] %v637
        %650 = vst [vmem:[%s235 + $0x10] sm:$0xff] %v638
        %651 = vst [vmem:[%s235 + $0x18] sm:$0xff] %v639
        %s652 = sand.u32 %s99, 1
        %s653 = scalar_lea.sflag [#allocation3], %s652
        %s654 = sand.u32 %s99, 1
        %s655 = smul.addr %s654, 32
        %s656 = scalar_lea.vmem [#allocation2], %s655
        %s657 = sand.u32 %s23, 1
        %s658 = scalar_lea.sflag [#allocation5], %s657
        %s659 = sand.u32 %s125, 1
        %s660 = smul.addr %s659, 32
        %s661 = scalar_lea.vmem [#allocation4], %s660
        %s662 = sand.u32 %s23, 1
        %s663 = scalar_lea.sflag [#allocation5], %s662
        %s664 = sand.u32 %s151, 1
        %s665 = smul.addr %s664, 32
        %s666 = scalar_lea.vmem [#allocation6], %s665
        // Predicated region
        $region33: #{tpu_custom_call.1} parent=31 // pred_check
          %p667 = pneg %p109
        $region34: #{tpu_custom_call.1} parent=31 // pred_check_branch
          %669 = sbr.rel (%p667) target = $region36
        $region35: #{tpu_custom_call.1} parent=31 // pred_region
          %671 = vsyncadd %s653, 0
          %s672 = smul.addr %s23, 8
          %s673 = smul.addr %s672, 4
          %s674 = scalar_lea.hbm %s3, %s673
          %s675 = sshll.u32 %s656, 4
          %s676 = int_to_ptr.vmem [resolvable:$true] %s675
          %s677 = sshll.u32 %s674, 4
          %s678 = int_to_ptr.hbm [resolvable:$true] %s677
          %683 = dma.vmem_to_hbm [thread:$0]  %s676, 512, %s678, %s653, 128, 128, 8
        $region36: #{tpu_custom_call.1} parent=31 // pred_fallthru
          _
        // Predicated region
        $region37: #{tpu_custom_call.1} parent=31 // pred_check
          %p684 = pneg %p135
        $region38: #{tpu_custom_call.1} parent=31 // pred_check_branch
          %686 = sbr.rel (%p684) target = $region40
        $region39: #{tpu_custom_call.1} parent=31 // pred_region
          %688 = vsyncadd %s658, 0
          %s689 = smul.addr %s23, 8
          %s690 = smul.addr %s689, 4
          %s691 = scalar_lea.hbm %s4, %s690
          %s692 = sshll.u32 %s661, 4
          %s693 = int_to_ptr.vmem [resolvable:$true] %s692
          %s694 = sshll.u32 %s691, 4
          %s695 = int_to_ptr.hbm [resolvable:$true] %s694
          %700 = dma.vmem_to_hbm [thread:$0]  %s693, 512, %s695, %s658, 128, 128, 8
        $region40: #{tpu_custom_call.1} parent=31 // pred_fallthru
          _
        // Predicated region
        $region41: #{tpu_custom_call.1} parent=31 // pred_check
          %p701 = pneg %p161
        $region42: #{tpu_custom_call.1} parent=31 // pred_check_branch
          %703 = sbr.rel (%p701) target = $region44
        $region43: #{tpu_custom_call.1} parent=31 // pred_region
          %705 = vsyncadd %s663, 0
          %s706 = smul.addr %s23, 8
          %s707 = smul.addr %s706, 4
          %s708 = scalar_lea.hbm %s5, %s707
          %s709 = sshll.u32 %s666, 4
          %s710 = int_to_ptr.vmem [resolvable:$true] %s709
          %s711 = sshll.u32 %s708, 4
          %s712 = int_to_ptr.hbm [resolvable:$true] %s711
          %717 = dma.vmem_to_hbm [thread:$0]  %s710, 512, %s712, %s663, 128, 128, 8
        $region44: #{tpu_custom_call.1} parent=31 // pred_fallthru
          _
      $region32: #{tpu_custom_call.1} parent=5 // pred_fallthru
        _
      %p718 = scmp.le.s32.totalorder 2, %s18
      // Predicated region
      $region45: #{tpu_custom_call.1} parent=5 // pred_check
        %p719 = pneg %p718
      $region46: #{tpu_custom_call.1} parent=5 // pred_check_branch
        %721 = sbr.rel (%p719) target = $region48
      $region47: #{tpu_custom_call.1} parent=5 // pred_region
        %s722 = ssub.s32 %s18, 2
        // Predicated region
        $region49: #{tpu_custom_call.1} parent=47 // pred_check
          %p723 = pneg %p115
        $region50: #{tpu_custom_call.1} parent=47 // pred_check_branch
          %725 = sbr.rel (%p723) target = $region52
        $region51: #{tpu_custom_call.1} parent=47 // pred_region
          %s726 = sand.u32 %s100, 1
          %s727 = scalar_lea.sflag [#allocation3], %s726
          %s728 = sand.u32 %s100, 1
          %s729 = smul.addr %s728, 32
          %s730 = scalar_lea.vmem [#allocation2], %s729
          %732 = dma.done %s727, 512
        $region52: #{tpu_custom_call.1} parent=47 // pred_fallthru
          _
        // Predicated region
        $region53: #{tpu_custom_call.1} parent=47 // pred_check
          %p733 = pneg %p141
        $region54: #{tpu_custom_call.1} parent=47 // pred_check_branch
          %735 = sbr.rel (%p733) target = $region56
        $region55: #{tpu_custom_call.1} parent=47 // pred_region
          %s736 = sand.u32 %s24, 1
          %s737 = scalar_lea.sflag [#allocation5], %s736
          %s738 = sand.u32 %s126, 1
          %s739 = smul.addr %s738, 32
          %s740 = scalar_lea.vmem [#allocation4], %s739
          %742 = dma.done %s737, 512
        $region56: #{tpu_custom_call.1} parent=47 // pred_fallthru
          _
        // Predicated region
        $region57: #{tpu_custom_call.1} parent=47 // pred_check
          %p743 = pneg %p167
        $region58: #{tpu_custom_call.1} parent=47 // pred_check_branch
          %745 = sbr.rel (%p743) target = $region60
        $region59: #{tpu_custom_call.1} parent=47 // pred_region
          %s746 = sand.u32 %s24, 1
          %s747 = scalar_lea.sflag [#allocation5], %s746
          %s748 = sand.u32 %s152, 1
          %s749 = smul.addr %s748, 32
          %s750 = scalar_lea.vmem [#allocation6], %s749
          %752 = dma.done %s747, 512
        $region60: #{tpu_custom_call.1} parent=47 // pred_fallthru
          _
      $region48: #{tpu_custom_call.1} parent=5 // pred_fallthru
        _
    $region6: #{tpu_custom_call.1} parent=1 // loop_footer
      %s22 = sadd.s32 1, %s18
    $region7: #{tpu_custom_call.1} parent=1 // loop_footer_branch
      %17 = sbr.rel target = $region3
    $region8: #{tpu_custom_call.1} parent=1 // loop_exit
      _
    %753 = vsyncpa [#allocation3], 1
    %s754 = scalar_lea.sflag [#allocation3], 1
    %755 = vsyncpa %s754, 1
    %756 = vsyncpa [#allocation5], 1
    %s757 = scalar_lea.sflag [#allocation5], 1
    %758 = vsyncpa %s757, 1

</llo_original>
